<compile_context>
chip_gen: v6e
topology: v6e:2x2x1
jax: 0.10.0
libtpu: 0.0.40
codegen_flags: <defaults>
</compile_context>

<pallas_src>
import jax
import jax.numpy as jnp
from jax.experimental import pallas as pl
from jax.experimental.pallas import tpu as pltpu

_LANE = 128
# Batches at/above this many (padded) lanes get split into >= 2 grid steps so
# the "parallel" axis can feed both TensorCores on v7x.
_MEGACORE_SPLIT_MIN = 16 * 1024


def linear_kernel(xt_ref, w_ref, b_ref, ot_ref):
    # xt_ref: (K, TB)  -- batch on the lane axis
    # w_ref : (N, K)   -- PyTorch weight layout, resident across grid steps
    # b_ref : (N, 1)   -- resident
    # ot_ref: (N, TB)  -- lane-dense output block (y^T)
    xt = xt_ref[...]
    w = w_ref[...]
    # Bias folded into the accumulator init (one broadcast per grid step).
    acc = jnp.broadcast_to(b_ref[...], ot_ref.shape)
    k_dim = xt.shape[0]  # static (== 4): fully unrolled VPU FMAs, no MXU
    # TODO(synk): on v7x (VALU-marginal) a sublane-broadcast load
    # xt_ref[pl.ds(k, N, stride=0), :] would move the row broadcast into the
    # vld slot; kept as an in-register broadcast here for portability.
    for k in range(k_dim):
        acc = acc + w[:, k:k + 1] * xt[k:k + 1, :]
    ot_ref[...] = acc.astype(ot_ref.dtype)


def _batch_tiling(B, tb_max):
    """Pick (TB, n_steps, B_pad): lane-multiple tile, grid steps, padded batch."""
    b_pad = pl.cdiv(B, _LANE) * _LANE          # batch rounded up to lane multiple
    n_steps = pl.cdiv(b_pad, tb_max)
    # Prefer >= 2 "parallel" steps once the batch is large enough that the
    # extra ~0.35 us/step is negligible (keeps both v7x TensorCores busy).
    if n_steps == 1 and b_pad >= _MEGACORE_SPLIT_MIN:
        n_steps = 2
    tb = pl.cdiv(pl.cdiv(b_pad, n_steps), _LANE) * _LANE
    n_steps = pl.cdiv(b_pad, tb)
    return tb, n_steps, tb * n_steps


def linear_t(x_t, w, b, *, tb=131072):
    """Transpose-free (lane-dense) contract.

    x_t: (K, B) f32, w: (N, K) f32 (PyTorch layout), b: (N,) f32 -> y^T (N, B).
    Preferred entry point for large batches: HBM traffic is exactly the
    operands + result, with no extra transpose copies.
    """
    K, B = x_t.shape
    N, K2 = w.shape
    assert K == K2 and b.shape == (N,)

    TB, n_steps, B_pad = _batch_tiling(B, tb)
    if B_pad != B:
        x_t = jnp.pad(x_t, ((0, 0), (0, B_pad - B)))
    b2d = b.reshape(N, 1)

    flops = 2 * B_pad * N * K + B_pad * N
    bytes_accessed = 4 * (K * B_pad + N * K + N + N * B_pad)

    y_t = pl.pallas_call(
        linear_kernel,
        out_shape=jax.ShapeDtypeStruct((N, B_pad), x_t.dtype),
        grid=(n_steps,),
        in_specs=[
            pl.BlockSpec((K, TB), lambda i: (0, i)),   # x^T: tiled along lanes
            pl.BlockSpec((N, K), lambda i: (0, 0)),    # W: resident
            pl.BlockSpec((N, 1), lambda i: (0, 0)),    # b: resident
        ],
        out_specs=pl.BlockSpec((N, TB), lambda i: (0, i)),
        compiler_params=pltpu.CompilerParams(
            dimension_semantics=("parallel",),
            vmem_limit_bytes=48 * 1024 * 1024,
        ),
        cost_estimate=pl.CostEstimate(
            flops=flops, transcendentals=0, bytes_accessed=bytes_accessed),
    )(x_t, w, b2d)

    return y_t if B_pad == B else y_t[:, :B]


def linear(x, w, b, *, tb=131072):
    """PyTorch-layout wrapper: x (B, K) -> y (B, N) = x @ W^T + b.

    NOTE: x.T / .T here are separate XLA copies (~3x HBM traffic at large B
    for this memory-bound op); large-batch callers should use linear_t.
    """
    return linear_t(x.T, w, b, tb=tb).T


if __name__ == "__main__":
    key = jax.random.PRNGKey(0)
    kx, kw, kb, kx2 = jax.random.split(key, 4)

    B, IN, OUT = 2, 4, 5

    # Deterministic synthetic parameters (nn.Linear(4, 5): W (5,4), b (5,)).
    x = jax.random.normal(kx, (B, IN), dtype=jnp.float32)
    w = jax.random.normal(kw, (OUT, IN), dtype=jnp.float32) * 0.1
    b = jax.random.normal(kb, (OUT,), dtype=jnp.float32) * 0.1

    # Literal spec size (B=2): PyTorch-layout wrapper, single padded block.
    y = jax.block_until_ready(linear(x, w, b))
    y_ref = x @ w.T + b
    assert y.shape == (B, OUT)
    assert jnp.allclose(y, y_ref, atol=1e-5, rtol=1e-5)

    # Transpose-free contract + multi-step "parallel" grid + non-divisible
    # batch (exercises the cdiv/pad/slice path) at a small tile.
    B2 = 1000
    x2 = jax.random.normal(kx2, (B2, IN), dtype=jnp.float32)
    y2_t = jax.block_until_ready(linear_t(x2.T, w, b, tb=256))
    y2_ref = x2 @ w.T + b
    assert y2_t.shape == (OUT, B2)
    assert jnp.allclose(y2_t.T, y2_ref, atol=1e-5, rtol=1e-5)

    print("KERNEL_OK")
</pallas_src>

<mosaic_0001>
module attributes {stable_mosaic.version = 11 : i64} {
  func.func @linear_kernel(%arg0: i32, %arg1: memref<4x128xf32, #tpu.memory_space<vmem>>, %arg2: memref<5x4xf32, #tpu.memory_space<vmem>>, %arg3: memref<5x1xf32, #tpu.memory_space<vmem>>, %arg4: memref<5x128xf32, #tpu.memory_space<vmem>>) attributes {dimension_semantics = [#tpu.dimension_semantics<parallel>], iteration_bounds = array<i64: 1>, scalar_prefetch = 0 : i64, scratch_operands = 0 : i64, tpu.core_type = #tpu.core_type<tc>, window_params = [{transform_indices = @transform_0, window_bounds = array<i64: 4, 128>}, {pipeline_mode = #tpu.pipeline_mode<synchronous>, transform_indices = @transform_1, window_bounds = array<i64: 5, 4>}, {pipeline_mode = #tpu.pipeline_mode<synchronous>, transform_indices = @transform_2, window_bounds = array<i64: 5, 1>}, {transform_indices = @transform_3, window_bounds = array<i64: 5, 128>}]} {
    %c0 = arith.constant 0 : index
    %c0_0 = arith.constant 0 : index
    %0 = vector.load %arg1[%c0, %c0_0] : memref<4x128xf32, #tpu.memory_space<vmem>>, vector<4x128xf32>
    %c0_1 = arith.constant 0 : index
    %c0_2 = arith.constant 0 : index
    %1 = vector.load %arg2[%c0_1, %c0_2] : memref<5x4xf32, #tpu.memory_space<vmem>>, vector<5x4xf32>
    %c0_3 = arith.constant 0 : index
    %c0_4 = arith.constant 0 : index
    %2 = vector.load %arg3[%c0_3, %c0_4] : memref<5x1xf32, #tpu.memory_space<vmem>>, vector<5x1xf32>
    %3 = vector.shape_cast %2 : vector<5x1xf32> to vector<5x1xf32>
    %4 = vector.broadcast %3 : vector<5x1xf32> to vector<5x128xf32>
    %5 = vector.extract_strided_slice %1 {offsets = [0, 0], sizes = [5, 1], strides = [1, 1]} : vector<5x4xf32> to vector<5x1xf32>
    %6 = vector.extract_strided_slice %0 {offsets = [0, 0], sizes = [1, 128], strides = [1, 1]} : vector<4x128xf32> to vector<1x128xf32>
    %7 = vector.broadcast %5 : vector<5x1xf32> to vector<5x128xf32>
    %8 = vector.broadcast %6 : vector<1x128xf32> to vector<5x128xf32>
    %9 = arith.mulf %7, %8 : vector<5x128xf32>
    %10 = arith.addf %4, %9 : vector<5x128xf32>
    %11 = vector.extract_strided_slice %1 {offsets = [0, 1], sizes = [5, 1], strides = [1, 1]} : vector<5x4xf32> to vector<5x1xf32>
    %12 = vector.extract_strided_slice %0 {offsets = [1, 0], sizes = [1, 128], strides = [1, 1]} : vector<4x128xf32> to vector<1x128xf32>
    %13 = vector.broadcast %11 : vector<5x1xf32> to vector<5x128xf32>
    %14 = vector.broadcast %12 : vector<1x128xf32> to vector<5x128xf32>
    %15 = arith.mulf %13, %14 : vector<5x128xf32>
    %16 = arith.addf %10, %15 : vector<5x128xf32>
    %17 = vector.extract_strided_slice %1 {offsets = [0, 2], sizes = [5, 1], strides = [1, 1]} : vector<5x4xf32> to vector<5x1xf32>
    %18 = vector.extract_strided_slice %0 {offsets = [2, 0], sizes = [1, 128], strides = [1, 1]} : vector<4x128xf32> to vector<1x128xf32>
    %19 = vector.broadcast %17 : vector<5x1xf32> to vector<5x128xf32>
    %20 = vector.broadcast %18 : vector<1x128xf32> to vector<5x128xf32>
    %21 = arith.mulf %19, %20 : vector<5x128xf32>
    %22 = arith.addf %16, %21 : vector<5x128xf32>
    %23 = vector.extract_strided_slice %1 {offsets = [0, 3], sizes = [5, 1], strides = [1, 1]} : vector<5x4xf32> to vector<5x1xf32>
    %24 = vector.extract_strided_slice %0 {offsets = [3, 0], sizes = [1, 128], strides = [1, 1]} : vector<4x128xf32> to vector<1x128xf32>
    %25 = vector.broadcast %23 : vector<5x1xf32> to vector<5x128xf32>
    %26 = vector.broadcast %24 : vector<1x128xf32> to vector<5x128xf32>
    %27 = arith.mulf %25, %26 : vector<5x128xf32>
    %28 = arith.addf %22, %27 : vector<5x128xf32>
    %c0_5 = arith.constant 0 : index
    %c0_6 = arith.constant 0 : index
    %29 = vector.load %arg4[%c0_5, %c0_6] : memref<5x128xf32, #tpu.memory_space<vmem>>, vector<5x128xf32>
    tpu.vector_store %arg4[%c0_5, %c0_6], %28 {strides = array<i32>} : memref<5x128xf32, #tpu.memory_space<vmem>>, vector<5x128xf32>,
    return
  }
  func.func @transform_0(%arg0: i32) -> (i32, i32) {
    %c0_i32 = arith.constant 0 : i32
    %c0_i32_0 = arith.constant 0 : i32
    return %c0_i32, %arg0 : i32, i32
  }
  func.func @transform_1(%arg0: i32) -> (i32, i32) {
    %c0_i32 = arith.constant 0 : i32
    %c0_i32_0 = arith.constant 0 : i32
    %c0_i32_1 = arith.constant 0 : i32
    return %c0_i32, %c0_i32_0 : i32, i32
  }
  func.func @transform_2(%arg0: i32) -> (i32, i32) {
    %c0_i32 = arith.constant 0 : i32
    %c0_i32_0 = arith.constant 0 : i32
    %c0_i32_1 = arith.constant 0 : i32
    return %c0_i32, %c0_i32_0 : i32, i32
  }
  func.func @transform_3(%arg0: i32) -> (i32, i32) {
    %c0_i32 = arith.constant 0 : i32
    %c0_i32_0 = arith.constant 0 : i32
    return %c0_i32, %arg0 : i32, i32
  }
}

</mosaic_0001>

<llo_original>
// kernel: tpu_custom_call.1
$region0: #{tpu_custom_call.1}
  #allocation0 [shape = 'u32[]', space=smem, size = 0x4, offset = 0x4, fixed_abs, tag = 'smem constant byte address 0x4 - core index']
  #allocation1 [shape = 'u32[144,128]{1,0:T(1,128)}', space=vmem, size = 0x12000, scoped, tag = 'internal scratch']
  %s0 = inlined_call_operand.vmem [shape: f32[4,128], index: 0, kind: input, shape index: {}]
  %s1 = inlined_call_operand.vmem [shape: f32[5,4], index: 1, kind: input, shape index: {}]
  %s2 = inlined_call_operand.vmem [shape: f32[5,1], index: 2, kind: input, shape index: {}]
  %s3 = inlined_call_operand.hbm [shape: f32[5,128], index: 3, kind: output, shape index: {}]
  %s4 = sld [smem:[#allocation0]]
  $region22: #{tpu_custom_call.1} parent=0
    _
  %s6 = ssub.s32 1, %s4
  %s7 = scalar_select 0, %s6, %s4
  $region1: #{tpu_custom_call.1} parent=0
    #allocation2 [shape = 'u8[4096]{0}', space=vmem, size = 0x1000, scoped, tag = 'output window, operand 0, single buffered']
    #allocation3 [shape = 's32[1]{0}', space=sflag, size = 0x4, scoped, tag = 'scoped memory for tpu_custom_call.1']
    %8 = vsyncpa [#allocation3], 0
    // Predicated region
    $region2: #{tpu_custom_call.1} parent=1 // pred_check
      _
    $region3: #{tpu_custom_call.1} parent=1 // pred_check_branch
      %10 = sbr.rel (0) target = $region5
    $region4: #{tpu_custom_call.1} parent=1 // pred_region
      _
    $region5: #{tpu_custom_call.1} parent=1 // pred_fallthru
      _
    // Predicated region
    $region6: #{tpu_custom_call.1} parent=1 // pred_check
      _
    $region7: #{tpu_custom_call.1} parent=1 // pred_check_branch
      %12 = sbr.rel (0) target = $region9
    $region8: #{tpu_custom_call.1} parent=1 // pred_region
      _
    $region9: #{tpu_custom_call.1} parent=1 // pred_fallthru
      _
    // Predicated region
    $region10: #{tpu_custom_call.1} parent=1 // pred_check
      _
    $region11: #{tpu_custom_call.1} parent=1 // pred_check_branch
      %14 = sbr.rel (0) target = $region13
    $region12: #{tpu_custom_call.1} parent=1 // pred_region
      _
    $region13: #{tpu_custom_call.1} parent=1 // pred_fallthru
      _
    %v15 = vld [vmem:[%s0] sm:$0xf]
    %v16 = vld [vmem:[%s1] sm:$0x1f]
    %v17 = vld [vmem:[%s2] sm:$0x1f]
    %19 = vset.pattern.permute.xlu0 0
    %20 = vperm.xlu0 %19, %v17
    %v21 = vpop.permute.xlu0 %20
    %24 = vset.pattern.permute.xlu0 0
    %25 = vperm.xlu0 %24, %v16
    %v26 = vpop.permute.xlu0 %25
    %v28 = vlaneseq
    %v29 = vshrl.u32 %v28, 7
    %v30 = vsub.s32 0, %v29
    %v31 = vrot.slane %v15, %v30
    %v32 = vmul.f32 %v26, %v31
    %v33 = vadd.f32 %v21, %v32
    %34 = vset.pattern.permute.xlu0 1
    %35 = vperm.xlu0 %34, %v16
    %v36 = vpop.permute.xlu0 %35
    %v38 = vlaneseq
    %v39 = vshrl.u32 %v38, 7
    %v40 = vsub.s32 1, %v39
    %v41 = vrot.slane %v15, %v40
    %v42 = vmul.f32 %v36, %v41
    %v43 = vadd.f32 %v33, %v42
    %44 = vset.pattern.permute.xlu0 2
    %45 = vperm.xlu0 %44, %v16
    %v46 = vpop.permute.xlu0 %45
    %v48 = vlaneseq
    %v49 = vshrl.u32 %v48, 7
    %v50 = vsub.s32 2, %v49
    %v51 = vrot.slane %v15, %v50
    %v52 = vmul.f32 %v46, %v51
    %v53 = vadd.f32 %v43, %v52
    %54 = vset.pattern.permute.xlu0 3
    %55 = vperm.xlu0 %54, %v16
    %v56 = vpop.permute.xlu0 %55
    %v58 = vlaneseq
    %v59 = vshrl.u32 %v58, 7
    %v60 = vsub.s32 3, %v59
    %v61 = vrot.slane %v15, %v60
    %v62 = vmul.f32 %v56, %v61
    %v63 = vadd.f32 %v53, %v62
    %64 = vst [vmem:[#allocation2] sm:$0x1f] %v63
    // Predicated region
    $region14: #{tpu_custom_call.1} parent=1 // pred_check
      _
    $region15: #{tpu_custom_call.1} parent=1 // pred_check_branch
      %66 = sbr.rel (0) target = $region17
    $region16: #{tpu_custom_call.1} parent=1 // pred_region
      %s68 = ssub.s32 128, 128
      %69 = vsyncadd [#allocation3], %s68
      %s71 = sshll.u32 [#allocation2], 4
      %s72 = int_to_ptr.vmem [resolvable:$true] %s71
      %74 = dma.vmem_to_hbm [thread:$0]  %s72, 128, %s3, [#allocation3]
    $region17: #{tpu_custom_call.1} parent=1 // pred_fallthru
      _
    // Predicated region
    $region18: #{tpu_custom_call.1} parent=1 // pred_check
      _
    $region19: #{tpu_custom_call.1} parent=1 // pred_check_branch
      %76 = sbr.rel (0) target = $region21
    $region20: #{tpu_custom_call.1} parent=1 // pred_region
      %77 = dma.done [#allocation3], 128
    $region21: #{tpu_custom_call.1} parent=1 // pred_fallthru
      _
    %78 = vsyncpa [#allocation3], 1

</llo_original>
